<compile_context>
chip_gen: v6e
topology: v6e:2x2x1
jax: 0.10.0
libtpu: 0.0.40
codegen_flags: <defaults>
</compile_context>

<pallas_src>
import math
import functools

import jax
import jax.numpy as jnp
from jax.experimental import pallas as pl
from jax.experimental.pallas import tpu as pltpu


def make_pe_table(d_model: int, max_len: int = 5000) -> jnp.ndarray:
    """Deterministic sinusoidal table, identical to the PyTorch __init__."""
    position = jnp.arange(0, max_len, dtype=jnp.float32)[:, None]          # (L, 1)
    div_term = jnp.exp(jnp.arange(0, d_model, 2, dtype=jnp.float32)
                       * -(math.log(10000.0) / d_model))                   # (D/2,)
    pe = jnp.zeros((max_len, d_model), dtype=jnp.float32)
    pe = pe.at[:, 0::2].set(jnp.sin(position * div_term))
    pe = pe.at[:, 1::2].set(jnp.cos(position * div_term))
    return pe                                                              # (L, D)


def _posenc_kernel(seed_ref, x_ref, pe_ref, o_ref, *, keep_prob: float,
                   apply_dropout: bool, n_per_batch: int, chunk: int):
    # x_ref: (B, C), pe_ref: (1, C) -> sublane broadcast over batch rows.
    y = x_ref[...] + pe_ref[...]

    if apply_dropout:
        b, c = x_ref.shape
        # Stateless counter-based hash over the global element index.
        row = jax.lax.broadcasted_iota(jnp.int32, (b, c), 0)
        col = jax.lax.broadcasted_iota(jnp.int32, (b, c), 1)
        off = pl.program_id(0) * chunk
        idx = jax.lax.convert_element_type(row * n_per_batch + off + col,
                                           jnp.uint32)
        seed_u = jax.lax.convert_element_type(seed_ref[0], jnp.uint32)
        h = idx + seed_u * jnp.uint32(0x9E3779B9)
        h = h ^ (h >> 16)
        h = h * jnp.uint32(0x7FEB352D)
        h = h ^ (h >> 15)
        h = h * jnp.uint32(0x846CA68B)
        h = h ^ (h >> 16)
        # keep with prob keep_prob: raw uint32 threshold compare (no f32 math).
        thr = jnp.uint32(min(int(keep_prob * (1 << 32)), (1 << 32) - 1))
        keep = h < thr
        scale = jnp.asarray(1.0 / keep_prob, dtype=y.dtype)
        y = jnp.where(keep, y * scale, jnp.asarray(0, dtype=y.dtype))

    o_ref[...] = y.astype(o_ref.dtype)


def _pick_chunk(n: int, batch: int, itemsize: int,
                target_bytes: int = 2 * 1024 * 1024) -> int:
    """Largest multiple-of-128 divisor of n so a (batch, C) block is ~target_bytes."""
    if n % 128 != 0:
        return n                        # last dim == full array dim -> still legal
    max_elems = max(128, target_bytes // max(batch * itemsize, 1))
    if n <= max_elems:
        return n
    c = (max_elems // 128) * 128
    while c >= 128:
        if n % c == 0:
            return c
        c -= 128
    return n


def positional_encoding(x: jnp.ndarray, pe_table: jnp.ndarray, *,
                        dropout_p: float = 0.1, training: bool = True,
                        seed: int = 0) -> jnp.ndarray:
    """x: (B, S, D). Returns (B, S, D) = dropout(x + pe[:S])."""
    B, S, D = x.shape
    N = S * D

    apply_dropout = training and dropout_p > 0.0
    keep_prob = 1.0 - dropout_p
    if apply_dropout and keep_prob <= 0.0:
        return jnp.zeros_like(x)        # p = 1.0 drops everything

    # Lane-dense flattened views (free reshapes: row-major contiguous).
    x2 = x.reshape(B, N)
    pe2 = pe_table[:S, :].astype(x.dtype).reshape(1, N)

    C = _pick_chunk(N, B, x.dtype.itemsize)
    n_chunks = N // C

    kernel = functools.partial(_posenc_kernel,
                               keep_prob=keep_prob,
                               apply_dropout=apply_dropout,
                               n_per_batch=N,
                               chunk=C)

    seed_arr = jnp.array([seed], dtype=jnp.int32)

    out2 = pl.pallas_call(
        kernel,
        out_shape=jax.ShapeDtypeStruct((B, N), x.dtype),
        grid_spec=pltpu.PrefetchScalarGridSpec(
            num_scalar_prefetch=1,
            grid=(n_chunks,),
            in_specs=[
                pl.BlockSpec((B, C), lambda c, seed: (0, c)),   # x chunk (all batches)
                pl.BlockSpec((1, C), lambda c, seed: (0, c)),   # pe chunk (shared)
            ],
            out_specs=pl.BlockSpec((B, C), lambda c, seed: (0, c)),
        ),
        compiler_params=pltpu.CompilerParams(
            dimension_semantics=("parallel",),  # stateless hash -> safe to shard
        ),
    )(seed_arr, x2, pe2)

    return out2.reshape(B, S, D)


if __name__ == "__main__":
    B, S, D = 2, 8, 32
    key = jax.random.PRNGKey(0)
    x = jax.random.normal(key, (B, S, D), dtype=jnp.float32)

    pe_table = make_pe_table(D, max_len=5000)

    # Training-mode forward (dropout active), like the PyTorch default.
    out = positional_encoding(x, pe_table, dropout_p=0.1, training=True, seed=0)
    out = jax.block_until_ready(out)
    assert out.shape == (B, S, D)
    # Dropout sanity: most elements kept (keep_prob = 0.9), some zeroed/scaled.
    kept_frac = jnp.mean(jnp.where(out == 0, 0.0, 1.0))
    assert kept_frac > 0.5, "dropout mask looks degenerate"

    # Deterministic (eval / no-dropout) path vs pure-JAX reference.
    out_eval = positional_encoding(x, pe_table, dropout_p=0.1, training=False)
    out_eval = jax.block_until_ready(out_eval)
    ref = x + pe_table[:S][None, :, :]
    assert jnp.allclose(out_eval, ref, atol=1e-6), "mismatch vs reference add"

    print("KERNEL_OK")
</pallas_src>

<mosaic_0001>
module attributes {stable_mosaic.version = 11 : i64} {
  func.func @_posenc_kernel(%arg0: i32, %arg1: memref<1xi32, #tpu.memory_space<smem>>, %arg2: memref<2x256xf32, #tpu.memory_space<vmem>>, %arg3: memref<1x256xf32, #tpu.memory_space<vmem>>, %arg4: memref<2x256xf32, #tpu.memory_space<vmem>>) attributes {dimension_semantics = [#tpu.dimension_semantics<parallel>], iteration_bounds = array<i64: 1>, scalar_prefetch = 1 : i64, scratch_operands = 0 : i64, tpu.core_type = #tpu.core_type<tc>, window_params = [{transform_indices = @transform_0, window_bounds = array<i64: 2, 256>}, {transform_indices = @transform_1, window_bounds = array<i64: 1, 256>}, {transform_indices = @transform_2, window_bounds = array<i64: 2, 256>}]} {
    %c0 = arith.constant 0 : index
    %c0_0 = arith.constant 0 : index
    %0 = vector.load %arg2[%c0, %c0_0] : memref<2x256xf32, #tpu.memory_space<vmem>>, vector<2x256xf32>
    %c0_1 = arith.constant 0 : index
    %c0_2 = arith.constant 0 : index
    %1 = vector.load %arg3[%c0_1, %c0_2] : memref<1x256xf32, #tpu.memory_space<vmem>>, vector<1x256xf32>
    %2 = vector.broadcast %1 : vector<1x256xf32> to vector<2x256xf32>
    %3 = arith.addf %0, %2 : vector<2x256xf32>
    %4 = tpu.iota {dimensions = array<i32: 0>} : vector<2x256xi32>
    %5 = tpu.iota {dimensions = array<i32: 1>} : vector<2x256xi32>
    %c256_i32 = arith.constant 256 : i32
    %6 = arith.muli %arg0, %c256_i32 : i32
    %c256_i32_3 = arith.constant 256 : i32
    %7 = vector.broadcast %c256_i32_3 : i32 to vector<2x256xi32>
    %8 = arith.muli %4, %7 : vector<2x256xi32>
    %9 = vector.broadcast %6 : i32 to vector<2x256xi32>
    %10 = arith.addi %8, %9 : vector<2x256xi32>
    %11 = arith.addi %10, %5 : vector<2x256xi32>
    %c0_4 = arith.constant 0 : index
    %12 = memref.load %arg1[%c0_4] : memref<1xi32, #tpu.memory_space<smem>>
    %c-1640531527_i32 = arith.constant -1640531527 : i32
    %13 = arith.muli %12, %c-1640531527_i32 : i32
    %14 = vector.broadcast %13 : i32 to vector<2x256xi32>
    %15 = arith.addi %11, %14 : vector<2x256xi32>
    %c16_i32 = arith.constant 16 : i32
    %16 = vector.broadcast %c16_i32 : i32 to vector<2x256xi32>
    %17 = arith.shrui %15, %16 : vector<2x256xi32>
    %18 = arith.xori %15, %17 : vector<2x256xi32>
    %c2146121005_i32 = arith.constant 2146121005 : i32
    %19 = vector.broadcast %c2146121005_i32 : i32 to vector<2x256xi32>
    %20 = arith.muli %18, %19 : vector<2x256xi32>
    %c15_i32 = arith.constant 15 : i32
    %21 = vector.broadcast %c15_i32 : i32 to vector<2x256xi32>
    %22 = arith.shrui %20, %21 : vector<2x256xi32>
    %23 = arith.xori %20, %22 : vector<2x256xi32>
    %c-2073254261_i32 = arith.constant -2073254261 : i32
    %24 = vector.broadcast %c-2073254261_i32 : i32 to vector<2x256xi32>
    %25 = arith.muli %23, %24 : vector<2x256xi32>
    %c16_i32_5 = arith.constant 16 : i32
    %26 = vector.broadcast %c16_i32_5 : i32 to vector<2x256xi32>
    %27 = arith.shrui %25, %26 : vector<2x256xi32>
    %28 = arith.xori %25, %27 : vector<2x256xi32>
    %c-429496730_i32 = arith.constant -429496730 : i32
    %29 = vector.broadcast %c-429496730_i32 : i32 to vector<2x256xi32>
    %30 = arith.cmpi ult, %28, %29 : vector<2x256xi32>
    %cst = arith.constant 1.11111116 : f32
    %31 = vector.broadcast %cst : f32 to vector<2x256xf32>
    %32 = arith.mulf %3, %31 : vector<2x256xf32>
    %cst_6 = arith.constant 0.000000e+00 : f32
    %33 = vector.broadcast %cst_6 : f32 to vector<2x256xf32>
    %34 = arith.select %30, %32, %33 : vector<2x256xi1>, vector<2x256xf32>
    %c0_7 = arith.constant 0 : index
    %c0_8 = arith.constant 0 : index
    %35 = vector.load %arg4[%c0_7, %c0_8] : memref<2x256xf32, #tpu.memory_space<vmem>>, vector<2x256xf32>
    tpu.vector_store %arg4[%c0_7, %c0_8], %34 {strides = array<i32>} : memref<2x256xf32, #tpu.memory_space<vmem>>, vector<2x256xf32>,
    return
  }
  func.func @transform_0(%arg0: i32, %arg1: memref<1xi32, #tpu.memory_space<smem>>) -> (i32, i32) {
    %c0_i32 = arith.constant 0 : i32
    %c0_i32_0 = arith.constant 0 : i32
    return %c0_i32, %arg0 : i32, i32
  }
  func.func @transform_1(%arg0: i32, %arg1: memref<1xi32, #tpu.memory_space<smem>>) -> (i32, i32) {
    %c0_i32 = arith.constant 0 : i32
    %c0_i32_0 = arith.constant 0 : i32
    return %c0_i32, %arg0 : i32, i32
  }
  func.func @transform_2(%arg0: i32, %arg1: memref<1xi32, #tpu.memory_space<smem>>) -> (i32, i32) {
    %c0_i32 = arith.constant 0 : i32
    %c0_i32_0 = arith.constant 0 : i32
    return %c0_i32, %arg0 : i32, i32
  }
}

</mosaic_0001>

<llo_original>
// kernel: tpu_custom_call.1
$region0: #{tpu_custom_call.1}
  #allocation0 [shape = 'u32[]', space=smem, size = 0x4, offset = 0x4, fixed_abs, tag = 'smem constant byte address 0x4 - core index']
  #allocation1 [shape = 'u32[144,128]{1,0:T(1,128)}', space=vmem, size = 0x12000, scoped, tag = 'internal scratch']
  #allocation2 [shape = 's32[1]{0}', space=sflag, size = 0x4, scoped, tag = 'scoped memory for tpu_custom_call.1']
  #allocation3 [shape = 's32[1]{0:T(128)S(6)}', space=smem, size = 0x200, scoped, tag = 'prefetched SMEM operand 0']
  %s0 = inlined_call_operand.<no memory space> [shape: s32[1], index: 0, kind: input, shape index: {}]
  %s1 = inlined_call_operand.hbm [shape: f32[2,256], index: 1, kind: input, shape index: {}]
  %s2 = inlined_call_operand.vmem [shape: f32[1,256], index: 2, kind: input, shape index: {}]
  %s3 = inlined_call_operand.hbm [shape: f32[2,256], index: 3, kind: output, shape index: {}]
  %s4 = sld [smem:[#allocation0]]
  $region22: #{tpu_custom_call.1} parent=0
    _
  %s6 = ssub.s32 1, %s4
  %s7 = scalar_select 0, %s6, %s4
  %8 = sst [smem:[#allocation3]] %s0
  $region1: #{tpu_custom_call.1} parent=0
    #allocation4 [shape = 'u8[2048]{0}', space=vmem, size = 0x800, scoped, tag = 'input window, operand 1, single buffered']
    #allocation5 [shape = 's32[1]{0}', space=sflag, size = 0x4, scoped, tag = 'scoped memory for tpu_custom_call.1']
    #allocation6 [shape = 's32[1]{0}', space=sflag, size = 0x4, scoped, tag = 'scoped memory for tpu_custom_call.1']
    #allocation7 [shape = 'u8[2048]{0}', space=vmem, size = 0x800, scoped, tag = 'output window, operand 0, single buffered']
    %9 = vsyncpa [#allocation5], 0
    %10 = vsyncpa [#allocation6], 0
    // Predicated region
    $region2: #{tpu_custom_call.1} parent=1 // pred_check
      _
    $region3: #{tpu_custom_call.1} parent=1 // pred_check_branch
      %12 = sbr.rel (0) target = $region5
    $region4: #{tpu_custom_call.1} parent=1 // pred_region
      %s14 = ssub.s32 64, 64
      %15 = vsyncadd [#allocation5], %s14
      %s17 = sshll.u32 [#allocation4], 4
      %s18 = int_to_ptr.vmem [resolvable:$true] %s17
      %20 = dma.hbm_to_vmem [thread:$0]  %s1, 64, %s18, [#allocation5]
    $region5: #{tpu_custom_call.1} parent=1 // pred_fallthru
      _
    // Predicated region
    $region6: #{tpu_custom_call.1} parent=1 // pred_check
      _
    $region7: #{tpu_custom_call.1} parent=1 // pred_check_branch
      %22 = sbr.rel (0) target = $region9
    $region8: #{tpu_custom_call.1} parent=1 // pred_region
      _
    $region9: #{tpu_custom_call.1} parent=1 // pred_fallthru
      _
    // Predicated region
    $region10: #{tpu_custom_call.1} parent=1 // pred_check
      _
    $region11: #{tpu_custom_call.1} parent=1 // pred_check_branch
      %24 = sbr.rel (0) target = $region13
    $region12: #{tpu_custom_call.1} parent=1 // pred_region
      %25 = dma.done [#allocation5], 64
    $region13: #{tpu_custom_call.1} parent=1 // pred_fallthru
      _
    %v26 = vld [vmem:[#allocation4] sm:$0xf]
    %v27 = vld [vmem:[%s2] sm:$0x3]
    %v29 = vlaneseq
    %v30 = vshrl.u32 %v29, 7
    %v31 = vsub.s32 0, %v30
    %v32 = vrot.slane %v27, %v31
    %v33 = vlaneseq
    %v34 = vshrl.u32 %v33, 7
    %v35 = vsub.s32 1, %v34
    %v36 = vrot.slane %v27, %v35
    %v37 = vcombine.low %v32, %v36
    %v39 = vunpack.c.l.s4 1983009808
    %v40 = vunpack.c.0.s8 %v39
    %v41 = vlaneseq
    %v42 = vshrl.u32 %v41, 7
    %v43 = vsub.s32 %v40, %v42
    %v44 = vrot.slane %v37, %v43
    %v46 = vadd.f32 %v26, %v44
    %v47 = vlaneseq
    %v48 = vshrl.u32 %v47, 7
    %v49 = vlaneseq
    %v50 = vand.u32 %v49, 127
    %v51 = vadd.s32 %v50, 128
    %s52 = smul.u32 0, 256
    %v53 = vmul.u32 %v48, 256
    %v54 = vstv %s52
    %v55 = vadd.s32 %v53, %v54
    %v56 = vadd.s32 %v55, %v50
    %v57 = vadd.s32 %v55, %v51
    %s58 = sld [smem:[#allocation3]]
    %s59 = smul.u32 %s58, 2654435769
    %v60 = vstv %s59
    %v61 = vadd.s32 %v56, %v60
    %v62 = vadd.s32 %v57, %v60
    %v63 = vshrl.u32 %v61, 16
    %v64 = vshrl.u32 %v62, 16
    %v65 = vxor.u32 %v61, %v63
    %v66 = vxor.u32 %v62, %v64
    %v67 = vmul.u32 %v65, 2146121005
    %v68 = vmul.u32 %v66, 2146121005
    %v69 = vshrl.u32 %v67, 15
    %v70 = vshrl.u32 %v68, 15
    %v71 = vxor.u32 %v67, %v69
    %v72 = vxor.u32 %v68, %v70
    %v73 = vmul.u32 %v71, 2221713035
    %v74 = vmul.u32 %v72, 2221713035
    %v75 = vshrl.u32 %v73, 16
    %v76 = vshrl.u32 %v74, 16
    %v77 = vxor.u32 %v73, %v75
    %v78 = vxor.u32 %v74, %v76
    %vm79 = vcmp.lt.u32.totalorder %v77, 3865470566
    %vm80 = vcmp.lt.u32.totalorder %v78, 3865470566
    %v81 = vmul.f32 %v46, 1.1111112
    %v84 = vunpack.c.l.s4 1983009808
    %v85 = vunpack.c.0.s8 %v84
    %v86 = vlaneseq
    %v87 = vshrl.u32 %v86, 7
    %v88 = vsub.s32 %v85, %v87
    %v89 = vrot.slane %v81, %v88
    %v90 = vcombine.high %v89, %v89
    %v93 = vsel %vm79, %v89, 0.0
    %v94 = vsel %vm80, %v90, 0.0
    %v97 = vcombine.low %v93, %v94
    %v99 = vunpack.c.l.s4 1983009808
    %v100 = vunpack.c.0.s8 %v99
    %v101 = vlaneseq
    %v102 = vshrl.u32 %v101, 7
    %v103 = vsub.s32 %v100, %v102
    %v104 = vrot.slane %v97, %v103
    %106 = vst [vmem:[#allocation7] sm:$0xf] %v104
    // Predicated region
    $region14: #{tpu_custom_call.1} parent=1 // pred_check
      _
    $region15: #{tpu_custom_call.1} parent=1 // pred_check_branch
      %108 = sbr.rel (0) target = $region17
    $region16: #{tpu_custom_call.1} parent=1 // pred_region
      %s110 = ssub.s32 64, 64
      %111 = vsyncadd [#allocation6], %s110
      %s113 = sshll.u32 [#allocation7], 4
      %s114 = int_to_ptr.vmem [resolvable:$true] %s113
      %116 = dma.vmem_to_hbm [thread:$0]  %s114, 64, %s3, [#allocation6]
    $region17: #{tpu_custom_call.1} parent=1 // pred_fallthru
      _
    // Predicated region
    $region18: #{tpu_custom_call.1} parent=1 // pred_check
      _
    $region19: #{tpu_custom_call.1} parent=1 // pred_check_branch
      %118 = sbr.rel (0) target = $region21
    $region20: #{tpu_custom_call.1} parent=1 // pred_region
      %119 = dma.done [#allocation6], 64
    $region21: #{tpu_custom_call.1} parent=1 // pred_fallthru
      _
    %120 = vsyncpa [#allocation5], 1
    %121 = vsyncpa [#allocation6], 1

</llo_original>
